<compile_context>
chip_gen: v7x
topology: tpu7x:2x2x1
jax: 0.10.0
libtpu: 0.0.40
codegen_flags: <defaults>
</compile_context>

<pallas_src>
import functools

import jax
import jax.numpy as jnp
import numpy as np
from jax.experimental import pallas as pl
from jax.experimental.pallas import tpu as pltpu


def _round_up(x, m):
    return ((x + m - 1) // m) * m


def _plan_tiling(n_rows, hw, itemsize):
    """Pick a fully dense (R, T) tile and VMEM limit, generation-aware."""
    # Generation-aware VMEM budgeting: query physical VMEM, leave headroom for the
    # scoped limit, and size blocks so double-buffered in+out (4 big buffers) fits.
    try:
        vmem_cap = int(pltpu.get_tpu_info().vmem_capacity_bytes)
    except Exception:  # pragma: no cover - conservative fallback works everywhere
        vmem_cap = 64 * 1024 * 1024  # v7x per-core physical VMEM (smallest)
    vmem_limit = int(min((vmem_cap * 3) // 4, 96 * 1024 * 1024))
    max_block_bytes = max(vmem_limit // 8, 512 * 1024)

    itemsize = int(itemsize)
    lane = 128
    sub = 8 * max(1, 4 // itemsize)  # sublane packing: 8 (f32), 16 (bf16), 32 (i8)

    hw_pad = _round_up(hw, lane)
    max_r = _round_up(n_rows, sub)
    r = sub
    if r * hw_pad * itemsize <= max_block_bytes:
        # Whole (padded) spatial row fits: use it as the lane dim, grow the row dim.
        t = hw_pad
        while r < max_r and 2 * r * t * itemsize <= max_block_bytes:
            r *= 2
        r = min(_round_up(r, sub), max_r)
    else:
        # Spatial row too big for one block: tile the lane dim too (multiple of 128).
        t = max(lane, (max_block_bytes // (r * itemsize * lane)) * lane)
        hw_pad = _round_up(hw, t)
    rows_pad = _round_up(n_rows, r)
    return int(r), int(t), int(rows_pad), int(hw_pad), vmem_limit


def _sgn_kernel(x_ref, s_ref, b_ref, o_ref):
    """Pure streaming normalize+affine: o = x * scale + shift.

    x_ref : (R, T)  VMEM  input tile in its native dtype (lane-dense, sublane-dense)
    s_ref : (R, 1)  VMEM  per-row scale  (= weight / clamped spectral norm), float32
    b_ref : (R, 1)  VMEM  per-row shift  (= bias), float32
    o_ref : (R, T)  VMEM  output tile, same dtype as the input
    """
    y = x_ref[...].astype(jnp.float32) * s_ref[...] + b_ref[...]
    o_ref[...] = y.astype(o_ref.dtype)


@functools.partial(jax.jit, static_argnames=("num_groups", "modes_height", "eps"))
def spectral_group_norm(x, weight, bias, *, num_groups, modes_height, eps=1e-6):
    """JAX wrapper: trimmed rFFT + kept-mode energy in plain JAX, streaming FMA in Pallas."""
    B, C, H, W = x.shape
    assert C % num_groups == 0
    cpg = C // num_groups
    hm = modes_height // 2
    HW = H * W
    BC = B * C
    out_dtype = x.dtype

    # --- per-(batch, group) spectral energy of the kept low-frequency corner modes ---
    # TODO(synk): no Pallas FFT primitive exists; the FFT stays in XLA.  Trim its cost:
    # rfft along W, slice kept columns, then fft along H only on those columns.
    xf = jnp.fft.rfft(x.astype(jnp.float32), axis=-1, norm="forward")  # (B,C,H,W//2+1)
    xf = xf[..., : hm + 1]                                             # kept columns
    xh = jnp.fft.fft(xf, axis=-2, norm="forward")                      # (B,C,H,hm+1)
    bot_start = max(H - hm, hm)                                        # no double counting
    kept = jnp.concatenate([xh[:, :, :hm, :], xh[:, :, bot_start:, :]], axis=2)
    power = jnp.real(kept) ** 2 + jnp.imag(kept) ** 2                  # (B,C,rows,hm+1)
    sumsq = jnp.sum(power.reshape(B, num_groups, -1), axis=-1)         # (B, G)

    # --- hoisted norm math: per-row scale/shift (tiny, float32) ---
    norm = jnp.maximum(jnp.sqrt(sumsq), eps)                           # clip(min=eps)
    inv = (1.0 / norm)[:, :, None]                                     # (B, G, 1)
    w3 = weight.reshape(1, num_groups, cpg).astype(jnp.float32)
    b3 = bias.reshape(1, num_groups, cpg).astype(jnp.float32)
    scale = (w3 * inv).reshape(BC, 1)                                  # (B*C, 1)
    shift = jnp.broadcast_to(b3, (B, num_groups, cpg)).reshape(BC, 1)  # (B*C, 1)

    # --- lane/sublane-dense flat layout for the streaming kernel ---
    x2 = x.reshape(BC, HW)
    R, T, rows_pad, hw_pad, vmem_limit = _plan_tiling(BC, HW, x2.dtype.itemsize)
    if rows_pad != BC or hw_pad != HW:
        x2 = jnp.pad(x2, ((0, rows_pad - BC), (0, hw_pad - HW)))
        scale = jnp.pad(scale, ((0, rows_pad - BC), (0, 0)))
        shift = jnp.pad(shift, ((0, rows_pad - BC), (0, 0)))

    grid = (rows_pad // R, hw_pad // T)

    out = pl.pallas_call(
        _sgn_kernel,
        out_shape=jax.ShapeDtypeStruct((rows_pad, hw_pad), out_dtype),
        grid=grid,
        in_specs=[
            pl.BlockSpec((R, T), lambda i, j: (i, j)),
            pl.BlockSpec((R, 1), lambda i, j: (i, 0)),
            pl.BlockSpec((R, 1), lambda i, j: (i, 0)),
        ],
        out_specs=pl.BlockSpec((R, T), lambda i, j: (i, j)),
        compiler_params=pltpu.CompilerParams(
            dimension_semantics=("parallel", "parallel"),
            vmem_limit_bytes=vmem_limit,
        ),
    )(x2, scale, shift)

    if rows_pad != BC or hw_pad != HW:
        out = out[:BC, :HW]
    return out.reshape(B, C, H, W)


def spectral_group_norm_reference(x, weight, bias, *, num_groups, modes_height, eps=1e-6):
    """Pure-jnp reference mirroring the PyTorch forward_2d (cutoff=False)."""
    B, C, H, W = x.shape
    hm = modes_height // 2
    Wf = W // 2 + 1
    xh = jnp.fft.rfft2(x.astype(jnp.float32), axes=(-2, -1), norm="forward")
    ref = jnp.zeros((B, C, H, Wf), dtype=xh.dtype)
    ref = ref.at[:, :, :hm, : hm + 1].set(xh[:, :, :hm, : hm + 1])
    ref = ref.at[:, :, H - hm :, : hm + 1].set(xh[:, :, H - hm :, : hm + 1])
    xg = x.astype(jnp.float32).reshape(B * num_groups, -1, H, W)
    rg = ref.reshape(B * num_groups, -1, H, Wf)
    norm = jnp.sqrt(jnp.sum(jnp.abs(rg) ** 2, axis=(1, 2, 3), keepdims=True))
    norm = jnp.maximum(norm, eps)
    out = (xg / norm).reshape(B, C, H, W)
    return weight[:, :, None, None] * out + bias[:, :, None, None]


# TODO(synk): the 1D forward path (forward_1d) is structurally identical (rfft over the
# last axis + per-group norm) and is not wired up here; only the 4D/NCHW path is implemented.

if __name__ == "__main__":
    B, C, H, W = 2, 4, 16, 16
    NUM_GROUPS = 2
    MODES_HEIGHT = 8  # half_modes_height = 4
    EPS = 1e-6

    key = jax.random.PRNGKey(0)
    kx, kw, kb = jax.random.split(key, 3)
    x = jax.random.normal(kx, (B, C, H, W), dtype=jnp.float32)
    # Module init is ones/zeros; use deterministic non-trivial values to exercise affine.
    weight = 1.0 + 0.1 * jax.random.normal(kw, (1, C), dtype=jnp.float32)
    bias = 0.1 * jax.random.normal(kb, (1, C), dtype=jnp.float32)

    out = spectral_group_norm(
        x, weight, bias, num_groups=NUM_GROUPS, modes_height=MODES_HEIGHT, eps=EPS
    )
    out = jax.block_until_ready(out)

    ref_out = spectral_group_norm_reference(
        x, weight, bias, num_groups=NUM_GROUPS, modes_height=MODES_HEIGHT, eps=EPS
    )
    np.testing.assert_allclose(np.asarray(out), np.asarray(ref_out), rtol=1e-4, atol=1e-5)

    print("KERNEL_OK")
</pallas_src>

<mosaic_0001>
module attributes {stable_mosaic.version = 11 : i64} {
  func.func @_sgn_kernel(%arg0: i32, %arg1: i32, %arg2: memref<8x256xf32, #tpu.memory_space<vmem>>, %arg3: memref<8x1xf32, #tpu.memory_space<vmem>>, %arg4: memref<8x1xf32, #tpu.memory_space<vmem>>, %arg5: memref<8x256xf32, #tpu.memory_space<vmem>>) attributes {dimension_semantics = [#tpu.dimension_semantics<parallel>, #tpu.dimension_semantics<parallel>], iteration_bounds = array<i64: 1, 1>, scalar_prefetch = 0 : i64, scratch_operands = 0 : i64, tpu.core_type = #tpu.core_type<tc>, window_params = [{transform_indices = @transform_0, window_bounds = array<i64: 8, 256>}, {transform_indices = @transform_1, window_bounds = array<i64: 8, 1>}, {transform_indices = @transform_2, window_bounds = array<i64: 8, 1>}, {transform_indices = @transform_3, window_bounds = array<i64: 8, 256>}]} {
    %c0 = arith.constant 0 : index
    %c0_0 = arith.constant 0 : index
    %0 = vector.load %arg2[%c0, %c0_0] : memref<8x256xf32, #tpu.memory_space<vmem>>, vector<8x256xf32>
    %c0_1 = arith.constant 0 : index
    %c0_2 = arith.constant 0 : index
    %1 = vector.load %arg3[%c0_1, %c0_2] : memref<8x1xf32, #tpu.memory_space<vmem>>, vector<8x1xf32>
    %2 = vector.broadcast %1 : vector<8x1xf32> to vector<8x256xf32>
    %3 = arith.mulf %0, %2 : vector<8x256xf32>
    %c0_3 = arith.constant 0 : index
    %c0_4 = arith.constant 0 : index
    %4 = vector.load %arg4[%c0_3, %c0_4] : memref<8x1xf32, #tpu.memory_space<vmem>>, vector<8x1xf32>
    %5 = vector.broadcast %4 : vector<8x1xf32> to vector<8x256xf32>
    %6 = arith.addf %3, %5 : vector<8x256xf32>
    %c0_5 = arith.constant 0 : index
    %c0_6 = arith.constant 0 : index
    %7 = vector.load %arg5[%c0_5, %c0_6] : memref<8x256xf32, #tpu.memory_space<vmem>>, vector<8x256xf32>
    tpu.vector_store %arg5[%c0_5, %c0_6], %6 {strides = array<i32>} : memref<8x256xf32, #tpu.memory_space<vmem>>, vector<8x256xf32>,
    return
  }
  func.func @transform_0(%arg0: i32, %arg1: i32) -> (i32, i32) {
    %c0_i32 = arith.constant 0 : i32
    return %arg0, %arg1 : i32, i32
  }
  func.func @transform_1(%arg0: i32, %arg1: i32) -> (i32, i32) {
    %c0_i32 = arith.constant 0 : i32
    %c0_i32_0 = arith.constant 0 : i32
    return %arg0, %c0_i32 : i32, i32
  }
  func.func @transform_2(%arg0: i32, %arg1: i32) -> (i32, i32) {
    %c0_i32 = arith.constant 0 : i32
    %c0_i32_0 = arith.constant 0 : i32
    return %arg0, %c0_i32 : i32, i32
  }
  func.func @transform_3(%arg0: i32, %arg1: i32) -> (i32, i32) {
    %c0_i32 = arith.constant 0 : i32
    return %arg0, %arg1 : i32, i32
  }
}

</mosaic_0001>

<llo_original>
// kernel: mul.16
$region0: #{mul.16}
  %s0 = inlined_call_operand.vmem [shape: f32[4], index: 0, kind: input, shape index: {}]
  %s1 = inlined_call_operand.vmem [shape: f32[2,2], index: 1, kind: output, shape index: {}]
  $region1: #{mul.16} parent=0
    #allocation0 [shape = 'u8[4096]{0}', space=vmem, size = 0x1000, scoped, tag = 'scoped mem for output reshape']
    #allocation1 [shape = 'u8[4096]{0}', space=vmem, size = 0x1000, scoped, tag = 'scoped mem for input reshape']
    %s3 = sshllo.u32 0, 1
    %v4 = vld [vmem:[%s0] sm:%s3]
    %5 = vst [vmem:[#allocation1] sm:%s3] %v4
    %v6 = vld [vmem:[#allocation1] sm:$0x1]
    %vm7 = vcmask 15360
    %8 = vst.msk [vmem:[#allocation0] sm:$0x1] %vm7, %v6
    %v9 = vld [vmem:[#allocation1] sm:$0x1]
    %10 = vrot.lane.b32.xlu0 %v9, 126
    %v11 = vpop.permute.xlu0 %10
    %vm12 = vcmask 15360
    %s13 = scalar_lea.vmem [#allocation0], 1
    %14 = vst.msk [vmem:[%s13] sm:$0x1] %vm12, %v11
    %s16 = sshllo.u32 0, 2
    %v18 = vld [vmem:[#allocation0] sm:%s16]
    %s19 = sshllo.u32 0, 2
    %20 = vst [vmem:[%s1] sm:%s19] %v18

// kernel: spectral_group_norm.1
$region0: #{spectral_group_norm.1}
  #allocation0 [shape = 'u32[]', space=smem, size = 0x4, offset = 0x4, fixed_abs, tag = 'smem constant byte address 0x4 - core index']
  #allocation1 [shape = 'u32[144,128]{1,0:T(1,128)}', space=vmem, size = 0x12000, scoped, tag = 'internal scratch']
  %s0 = inlined_call_operand.vmem [shape: f32[8,256], index: 0, kind: input, shape index: {}]
  %s1 = inlined_call_operand.vmem [shape: f32[8,1], index: 1, kind: input, shape index: {}]
  %s2 = inlined_call_operand.vmem [shape: f32[8,1], index: 2, kind: input, shape index: {}]
  %s3 = inlined_call_operand.vmem [shape: f32[8,256], index: 3, kind: output, shape index: {}]
  %s4 = sld [smem:[#allocation0]]
  $region22: #{spectral_group_norm.1} parent=0
    _
  %s6 = ssub.s32 1, %s4
  %s7 = scalar_select 0, %s6, %s4
  // Predicated region
  $region2: #{spectral_group_norm.1} parent=0 // pred_check
    _
  $region3: #{spectral_group_norm.1} parent=0 // pred_check_branch
    %9 = sbr.rel (0) target = $region5
  $region4: #{spectral_group_norm.1} parent=0 // pred_region
    _
  $region5: #{spectral_group_norm.1} parent=0 // pred_fallthru
    _
  // Predicated region
  $region6: #{spectral_group_norm.1} parent=0 // pred_check
    _
  $region7: #{spectral_group_norm.1} parent=0 // pred_check_branch
    %11 = sbr.rel (0) target = $region9
  $region8: #{spectral_group_norm.1} parent=0 // pred_region
    _
  $region9: #{spectral_group_norm.1} parent=0 // pred_fallthru
    _
  // Predicated region
  $region10: #{spectral_group_norm.1} parent=0 // pred_check
    _
  $region11: #{spectral_group_norm.1} parent=0 // pred_check_branch
    %13 = sbr.rel (0) target = $region13
  $region12: #{spectral_group_norm.1} parent=0 // pred_region
    _
  $region13: #{spectral_group_norm.1} parent=0 // pred_fallthru
    _
  %v14 = vld [vmem:[%s0] sm:$0xff]
  %v15 = vld [vmem:[%s0 + $0x8] sm:$0xff]
  %v16 = vld [vmem:[%s1] sm:$0xff]
  %18 = vset.pattern.permute.xlu0 0
  %19 = vperm.xlu0 %18, %v16
  %v20 = vpop.permute.xlu0 %19
  %v22 = vmul.f32 %v14, %v20
  %v23 = vmul.f32 %v15, %v20
  %v24 = vld [vmem:[%s2] sm:$0xff]
  %26 = vset.pattern.permute.xlu0 0
  %27 = vperm.xlu0 %26, %v24
  %v28 = vpop.permute.xlu0 %27
  %v30 = vadd.f32 %v22, %v28
  %v31 = vadd.f32 %v23, %v28
  %32 = vst [vmem:[%s3] sm:$0xff] %v30
  %33 = vst [vmem:[%s3 + $0x8] sm:$0xff] %v31
  // Predicated region
  $region14: #{spectral_group_norm.1} parent=0 // pred_check
    _
  $region15: #{spectral_group_norm.1} parent=0 // pred_check_branch
    %35 = sbr.rel (0) target = $region17
  $region16: #{spectral_group_norm.1} parent=0 // pred_region
    _
  $region17: #{spectral_group_norm.1} parent=0 // pred_fallthru
    _
  // Predicated region
  $region18: #{spectral_group_norm.1} parent=0 // pred_check
    _
  $region19: #{spectral_group_norm.1} parent=0 // pred_check_branch
    %37 = sbr.rel (0) target = $region21
  $region20: #{spectral_group_norm.1} parent=0 // pred_region
    _
  $region21: #{spectral_group_norm.1} parent=0 // pred_fallthru
    _

</llo_original>
